<compile_context>
chip_gen: v6e
topology: v6e:2x2x1
jax: 0.10.0
libtpu: 0.0.40
codegen_flags: <defaults>
</compile_context>

<pallas_src>
import jax
import jax.numpy as jnp
from jax.experimental import pallas as pl
from jax.experimental.pallas import tpu as pltpu

THRESHOLD = 0.2
_LANES = 128
_MAX_BLOCK_ROWS = 512  # 512 * 128 * 4 B = 256 KiB per input block (fits easily in VMEM)


def _round_up(x, m):
    return (x + m - 1) // m * m


# ----------------------------- kernels --------------------------------------


def _max_kernel(fake_ref, real_ref, out_ref):
    """Per-block (8,128) max partial of diff = |real - fake*mask|."""
    f = fake_ref[...]
    r = real_ref[...]
    diff = jnp.abs(r - jnp.where(r > 0.0, f, 0.0))
    # block_rows is a multiple of 8, so this reshape is tile-aligned (pure VPU reduce,
    # no cross-lane work); padded elements contribute diff == 0 (safe for max, diff >= 0).
    d3 = diff.reshape(-1, 8, _LANES)
    out_ref[...] = jnp.max(d3, axis=0, keepdims=True)


def _sum_kernel(delta_ref, fake_ref, real_ref, out_ref):
    """Per-block (8,128) sum partial of the BerHu loss map, given scalar delta (SMEM)."""
    delta = delta_ref[0]
    f = fake_ref[...]
    r = real_ref[...]
    diff = jnp.abs(r - jnp.where(r > 0.0, f, 0.0))

    d2 = diff * diff
    delta2 = delta * delta
    inv_2d = 1.0 / (2.0 * delta)  # one scalar reciprocal, reused for the whole block

    # part1 = -F.threshold(-diff, -delta, 0)   (strict comparison, as in torch)
    part1 = jnp.where(diff < delta, diff, 0.0)
    # part2 = (F.threshold(diff^2 - delta^2, 0, -delta^2) + delta^2) / (2*delta)
    part2 = (jnp.where(d2 - delta2 > 0.0, d2 - delta2, -delta2) + delta2) * inv_2d

    loss3 = (part1 + part2).reshape(-1, 8, _LANES)
    out_ref[...] = jnp.sum(loss3, axis=0, keepdims=True)


# ----------------------------- wrapper ---------------------------------------


def _tile_flat(x, rows_padded):
    """Flatten to (rows_padded, 128) f32, zero-padding the tail (padding is loss-neutral)."""
    flat = x.reshape(-1)
    pad = rows_padded * _LANES - flat.shape[0]
    if pad:
        flat = jnp.pad(flat, (0, pad))
    return flat.reshape(rows_padded, _LANES)


def berhu_loss(fake, real, threshold=THRESHOLD):
    """fake, real: NCHW float tensors. Returns the scalar BerHu loss (sum-reduced)."""
    fake = jnp.asarray(fake, jnp.float32)
    real = jnp.asarray(real, jnp.float32)
    if fake.shape != real.shape:
        # TODO(synk): bilinear upsample kept as plain-JAX glue (matches F.upsample,
        # align_corners=False / half-pixel centers); not a Pallas kernel.
        H, W = real.shape[-2], real.shape[-1]
        fake = jax.image.resize(fake, fake.shape[:-2] + (H, W), method="bilinear")

    n = int(real.size)
    rows = pl.cdiv(n, _LANES)
    block_rows = min(_MAX_BLOCK_ROWS, _round_up(rows, 8))
    rows_padded = _round_up(rows, block_rows)
    grid = rows_padded // block_rows

    f2 = _tile_flat(fake, rows_padded)
    r2 = _tile_flat(real, rows_padded)

    data_spec = pl.BlockSpec((block_rows, _LANES), lambda i: (i, 0))
    part_spec = pl.BlockSpec((1, 8, _LANES), lambda i: (i, 0, 0))
    params = pltpu.CompilerParams(dimension_semantics=("parallel",))

    # ---- pass 1: global max(diff) via lane/sublane-dense per-block partials ----
    part_max = pl.pallas_call(
        _max_kernel,
        out_shape=jax.ShapeDtypeStruct((grid, 8, _LANES), jnp.float32),
        grid_spec=pltpu.PrefetchScalarGridSpec(
            num_scalar_prefetch=0,
            grid=(grid,),
            in_specs=[data_spec, data_spec],
            out_specs=part_spec,
        ),
        compiler_params=params,
    )(f2, r2)

    delta = threshold * jnp.max(part_max)
    delta_arr = jnp.reshape(delta, (1,)).astype(jnp.float32)

    # ---- pass 2: per-block loss-sum partials, delta passed through SMEM ----
    part_sum = pl.pallas_call(
        _sum_kernel,
        out_shape=jax.ShapeDtypeStruct((grid, 8, _LANES), jnp.float32),
        grid_spec=pltpu.PrefetchScalarGridSpec(
            num_scalar_prefetch=0,
            grid=(grid,),
            in_specs=[
                pl.BlockSpec(memory_space=pltpu.MemorySpace.SMEM),  # delta scalar
                data_spec,
                data_spec,
            ],
            out_specs=part_spec,
        ),
        compiler_params=params,
    )(delta_arr, f2, r2)

    return jnp.sum(part_sum)


# ----------------------------- reference & test ------------------------------


def _reference(fake, real, threshold=THRESHOLD):
    """Pure-JAX mirror of the torch BerHuLoss.forward (same-shape path)."""
    mask = (real > 0).astype(fake.dtype)
    fakem = fake * mask
    diff = jnp.abs(real - fakem)
    delta = threshold * jnp.max(diff)
    part1 = jnp.where(-diff > -delta, diff, 0.0)
    part2 = jnp.where(diff**2 - delta**2 > 0.0, diff**2 - delta**2, -delta**2) + delta**2
    part2 = part2 / (2.0 * delta)
    return jnp.sum(part1 + part2)


if __name__ == "__main__":
    key = jax.random.PRNGKey(0)
    kf, kr = jax.random.split(key)
    B, C, H, W = 2, 4, 16, 16
    fake = jax.random.uniform(kf, (B, C, H, W), dtype=jnp.float32)
    # include some non-positive values so the `real > 0` mask is exercised
    real = jax.random.uniform(kr, (B, C, H, W), dtype=jnp.float32, minval=-0.25, maxval=1.0)

    loss = jax.block_until_ready(berhu_loss(fake, real))
    ref = jax.block_until_ready(_reference(fake, real))

    err = abs(float(loss) - float(ref))
    assert err <= 1e-3 * max(1.0, abs(float(ref))), (float(loss), float(ref))
    print("KERNEL_OK")
</pallas_src>

<mosaic_0001>
module attributes {stable_mosaic.version = 11 : i64} {
  func.func @_max_kernel(%arg0: i32, %arg1: memref<16x128xf32, #tpu.memory_space<vmem>>, %arg2: memref<16x128xf32, #tpu.memory_space<vmem>>, %arg3: memref<1x8x128xf32, #tpu.memory_space<vmem>>) attributes {dimension_semantics = [#tpu.dimension_semantics<parallel>], iteration_bounds = array<i64: 1>, scalar_prefetch = 0 : i64, scratch_operands = 0 : i64, tpu.core_type = #tpu.core_type<tc>, window_params = [{transform_indices = @transform_0, window_bounds = array<i64: 16, 128>}, {transform_indices = @transform_1, window_bounds = array<i64: 16, 128>}, {transform_indices = @transform_2, window_bounds = array<i64: 1, 8, 128>}]} {
    %c0 = arith.constant 0 : index
    %c0_0 = arith.constant 0 : index
    %0 = vector.load %arg1[%c0, %c0_0] : memref<16x128xf32, #tpu.memory_space<vmem>>, vector<16x128xf32>
    %c0_1 = arith.constant 0 : index
    %c0_2 = arith.constant 0 : index
    %1 = vector.load %arg2[%c0_1, %c0_2] : memref<16x128xf32, #tpu.memory_space<vmem>>, vector<16x128xf32>
    %cst = arith.constant 0.000000e+00 : f32
    %2 = vector.broadcast %cst : f32 to vector<16x128xf32>
    %3 = arith.cmpf ogt, %1, %2 : vector<16x128xf32>
    %cst_3 = arith.constant 0.000000e+00 : f32
    %4 = vector.broadcast %cst_3 : f32 to vector<16x128xf32>
    %5 = arith.select %3, %0, %4 : vector<16x128xi1>, vector<16x128xf32>
    %6 = arith.subf %1, %5 : vector<16x128xf32>
    %7 = math.absf %6 : vector<16x128xf32>
    %8 = vector.shape_cast %7 : vector<16x128xf32> to vector<2x8x128xf32>
    %cst_4 = arith.constant dense<0xFF800000> : vector<8x128xf32>
    %9 = vector.multi_reduction <maximumf>, %8, %cst_4 [0] : vector<2x8x128xf32> to vector<8x128xf32>
    %10 = vector.shape_cast %9 : vector<8x128xf32> to vector<1x8x128xf32>
    %c0_5 = arith.constant 0 : index
    %c0_6 = arith.constant 0 : index
    %c0_7 = arith.constant 0 : index
    %11 = vector.load %arg3[%c0_5, %c0_6, %c0_7] : memref<1x8x128xf32, #tpu.memory_space<vmem>>, vector<1x8x128xf32>
    tpu.vector_store %arg3[%c0_5, %c0_6, %c0_7], %10 {strides = array<i32>} : memref<1x8x128xf32, #tpu.memory_space<vmem>>, vector<1x8x128xf32>,
    return
  }
  func.func @transform_0(%arg0: i32) -> (i32, i32) {
    %c0_i32 = arith.constant 0 : i32
    %c0_i32_0 = arith.constant 0 : i32
    return %arg0, %c0_i32 : i32, i32
  }
  func.func @transform_1(%arg0: i32) -> (i32, i32) {
    %c0_i32 = arith.constant 0 : i32
    %c0_i32_0 = arith.constant 0 : i32
    return %arg0, %c0_i32 : i32, i32
  }
  func.func @transform_2(%arg0: i32) -> (i32, i32, i32) {
    %c0_i32 = arith.constant 0 : i32
    %c0_i32_0 = arith.constant 0 : i32
    %c0_i32_1 = arith.constant 0 : i32
    return %arg0, %c0_i32, %c0_i32_0 : i32, i32, i32
  }
}

</mosaic_0001>

<llo_original>
// kernel: tpu_custom_call.1
$region0: #{tpu_custom_call.1}
  #allocation0 [shape = 'u32[]', space=smem, size = 0x4, offset = 0x4, fixed_abs, tag = 'smem constant byte address 0x4 - core index']
  #allocation1 [shape = 'u32[144,128]{1,0:T(1,128)}', space=vmem, size = 0x12000, scoped, tag = 'internal scratch']
  %s0 = inlined_call_operand.hbm [shape: f32[16,128], index: 0, kind: input, shape index: {}]
  %s1 = inlined_call_operand.hbm [shape: f32[16,128], index: 1, kind: input, shape index: {}]
  %s2 = inlined_call_operand.hbm [shape: f32[1,8,128], index: 2, kind: output, shape index: {}]
  %s3 = sld [smem:[#allocation0]]
  $region26: #{tpu_custom_call.1} parent=0
    _
  %s5 = ssub.s32 1, %s3
  %s6 = scalar_select 0, %s5, %s3
  $region1: #{tpu_custom_call.1} parent=0
    #allocation2 [shape = 'u8[8192]{0}', space=vmem, size = 0x2000, scoped, tag = 'input window, operand 0, single buffered']
    #allocation3 [shape = 's32[1]{0}', space=sflag, size = 0x4, scoped, tag = 'scoped memory for tpu_custom_call.1']
    #allocation4 [shape = 's32[1]{0}', space=sflag, size = 0x4, scoped, tag = 'scoped memory for tpu_custom_call.1']
    #allocation5 [shape = 'u8[8192]{0}', space=vmem, size = 0x2000, scoped, tag = 'input window, operand 1, single buffered']
    #allocation6 [shape = 's32[1]{0}', space=sflag, size = 0x4, scoped, tag = 'scoped memory for tpu_custom_call.1']
    #allocation7 [shape = 'u8[4096]{0}', space=vmem, size = 0x1000, scoped, tag = 'output window, operand 0, single buffered']
    %7 = vsyncpa [#allocation3], 0
    %8 = vsyncpa [#allocation6], 0
    %9 = vsyncpa [#allocation4], 0
    // Predicated region
    $region2: #{tpu_custom_call.1} parent=1 // pred_check
      _
    $region3: #{tpu_custom_call.1} parent=1 // pred_check_branch
      %11 = sbr.rel (0) target = $region5
    $region4: #{tpu_custom_call.1} parent=1 // pred_region
      %s13 = ssub.s32 256, 256
      %14 = vsyncadd [#allocation3], %s13
      %s15 = sshll.u32 [#allocation2], 4
      %s16 = int_to_ptr.vmem [resolvable:$true] %s15
      %21 = dma.hbm_to_vmem [thread:$0]  %s0, 256, %s16, [#allocation3], 128, 128, 8
    $region5: #{tpu_custom_call.1} parent=1 // pred_fallthru
      _
    // Predicated region
    $region6: #{tpu_custom_call.1} parent=1 // pred_check
      _
    $region7: #{tpu_custom_call.1} parent=1 // pred_check_branch
      %23 = sbr.rel (0) target = $region9
    $region8: #{tpu_custom_call.1} parent=1 // pred_region
      %s25 = ssub.s32 256, 256
      %26 = vsyncadd [#allocation6], %s25
      %s27 = sshll.u32 [#allocation5], 4
      %s28 = int_to_ptr.vmem [resolvable:$true] %s27
      %33 = dma.hbm_to_vmem [thread:$0]  %s1, 256, %s28, [#allocation6], 128, 128, 8
    $region9: #{tpu_custom_call.1} parent=1 // pred_fallthru
      _
    // Predicated region
    $region10: #{tpu_custom_call.1} parent=1 // pred_check
      _
    $region11: #{tpu_custom_call.1} parent=1 // pred_check_branch
      %35 = sbr.rel (0) target = $region13
    $region12: #{tpu_custom_call.1} parent=1 // pred_region
      %36 = dma.done [#allocation3], 256
    $region13: #{tpu_custom_call.1} parent=1 // pred_fallthru
      _
    // Predicated region
    $region14: #{tpu_custom_call.1} parent=1 // pred_check
      _
    $region15: #{tpu_custom_call.1} parent=1 // pred_check_branch
      %38 = sbr.rel (0) target = $region17
    $region16: #{tpu_custom_call.1} parent=1 // pred_region
      %39 = dma.done [#allocation6], 256
    $region17: #{tpu_custom_call.1} parent=1 // pred_fallthru
      _
    %v40 = vld [vmem:[#allocation2] sm:$0xff]
    %v41 = vld [vmem:[#allocation2 + $0x8] sm:$0xff]
    %v42 = vld [vmem:[#allocation5] sm:$0xff]
    %v43 = vld [vmem:[#allocation5 + $0x8] sm:$0xff]
    %vm44 = vcmp.gt.f32.partialorder %v42, 0.0
    %vm45 = vcmp.gt.f32.partialorder %v43, 0.0
    %v46 = vsel %vm44, %v40, 0.0
    %v47 = vsel %vm45, %v41, 0.0
    %v48 = vsub.f32 %v42, %v46
    %v49 = vsub.f32 %v43, %v47
    %v50 = vand.u32 2147483647, %v48
    %v51 = vand.u32 2147483647, %v49
    %v52 = vmax.f32 %v50, %v51
    %53 = vst [vmem:[#allocation7] sm:$0xff] %v52
    // Predicated region
    $region18: #{tpu_custom_call.1} parent=1 // pred_check
      _
    $region19: #{tpu_custom_call.1} parent=1 // pred_check_branch
      %55 = sbr.rel (0) target = $region21
    $region20: #{tpu_custom_call.1} parent=1 // pred_region
      %s57 = ssub.s32 128, 128
      %58 = vsyncadd [#allocation4], %s57
      %s60 = sshll.u32 [#allocation7], 4
      %s61 = int_to_ptr.vmem [resolvable:$true] %s60
      %63 = dma.vmem_to_hbm [thread:$0]  %s61, 128, %s2, [#allocation4]
    $region21: #{tpu_custom_call.1} parent=1 // pred_fallthru
      _
    // Predicated region
    $region22: #{tpu_custom_call.1} parent=1 // pred_check
      _
    $region23: #{tpu_custom_call.1} parent=1 // pred_check_branch
      %65 = sbr.rel (0) target = $region25
    $region24: #{tpu_custom_call.1} parent=1 // pred_region
      %66 = dma.done [#allocation4], 128
    $region25: #{tpu_custom_call.1} parent=1 // pred_fallthru
      _
    %67 = vsyncpa [#allocation3], 1
    %68 = vsyncpa [#allocation6], 1
    %69 = vsyncpa [#allocation4], 1

</llo_original>
